<compile_context>
chip_gen: v7x
topology: tpu7x:2x2x1
jax: 0.10.0
libtpu: 0.0.40
codegen_flags: <defaults>
</compile_context>

<pallas_src>
import numpy as np
import jax
import jax.numpy as jnp
from jax.experimental import pallas as pl
from jax.experimental.pallas import tpu as pltpu


# ---------------------------------------------------------------------------
# Kernels: identity copy of a lane-dense (rows, n) slab.
# ---------------------------------------------------------------------------
def _copy_kernel(x_ref, o_ref):
    o_ref[...] = x_ref[...]


# ---------------------------------------------------------------------------
# Shape resolution (supports a single -1, like torch.Tensor.view)
# ---------------------------------------------------------------------------
def _resolve_shape(shape, n_elems):
    shape = list(int(s) for s in shape)
    neg = [i for i, s in enumerate(shape) if s == -1]
    if len(neg) > 1:
        raise ValueError("only one -1 allowed in View shape")
    if neg:
        known = int(np.prod([s for s in shape if s != -1], dtype=np.int64))
        if known == 0 or n_elems % known != 0:
            raise ValueError(f"cannot view {n_elems} elements as {tuple(shape)}")
        shape[neg[0]] = n_elems // known
    if int(np.prod(shape, dtype=np.int64)) != n_elems:
        raise ValueError(f"cannot view {n_elems} elements as {tuple(shape)}")
    return tuple(shape)


# ---------------------------------------------------------------------------
# Forward: View(*shape)(x) == x.view(x.shape[0], *shape)
# ---------------------------------------------------------------------------
def view_forward(x, shape, *, vmem_budget_bytes=8 << 20):
    """Pallas implementation of View: reshape keeping the batch dimension.

    TODO(synk): torch's `view` aliases storage (zero copy); a Pallas kernel has
    no aliasing equivalent, so the data is materialized once (lane-dense copy).
    """
    B = int(x.shape[0])
    n = int(np.prod(x.shape[1:], dtype=np.int64))
    tgt = _resolve_shape(shape, n)

    # Collapse non-batch dims to a single lane axis (metadata-only reshape).
    x2d = x.reshape(B, n)
    nbytes = B * n * x.dtype.itemsize

    if nbytes <= vmem_budget_bytes:
        # Single fully-resident block: one launch, no grid pipelining, the
        # block equals the full array so the (8, 128) rule is satisfied and
        # stores are unmasked when n % 128 == 0 (true for the demo: n = 1024).
        y2d = pl.pallas_call(
            _copy_kernel,
            out_shape=jax.ShapeDtypeStruct((B, n), x.dtype),
            in_specs=[pl.BlockSpec(memory_space=pltpu.MemorySpace.VMEM)],
            out_specs=pl.BlockSpec(memory_space=pltpu.MemorySpace.VMEM),
        )(x2d)
    else:
        # Large-input fallback: tile rows only; keep the full (lane-dense)
        # flat width per block so stores stay unmasked.
        row_bytes = n * x.dtype.itemsize
        # /4: input + output, each double-buffered by the BlockSpec pipeline.
        rows = (vmem_budget_bytes // (4 * row_bytes)) // 8 * 8
        rows = int(max(8, rows))
        rows = min(rows, B)  # rows == B (full dim) is also layout-legal
        grid = (pl.cdiv(B, rows),)
        y2d = pl.pallas_call(
            _copy_kernel,
            out_shape=jax.ShapeDtypeStruct((B, n), x.dtype),
            grid_spec=pltpu.PrefetchScalarGridSpec(
                num_scalar_prefetch=0,
                grid=grid,
                in_specs=[pl.BlockSpec((rows, n), lambda i: (i, 0))],
                out_specs=pl.BlockSpec((rows, n), lambda i: (i, 0)),
            ),
            compiler_params=pltpu.CompilerParams(
                dimension_semantics=("parallel",)),
        )(x2d)

    # Expand to the requested view shape (metadata-only reshape).
    return y2d.reshape((B,) + tgt)


if __name__ == "__main__":
    key = jax.random.PRNGKey(0)
    B, C, H, W = 2, 4, 16, 16
    x = jax.random.normal(key, (B, C, H, W), jnp.float32)

    # View(16, 64): (2, 4, 16, 16) -> (2, 16, 64)
    y1 = jax.block_until_ready(view_forward(x, (16, 64)))
    ref1 = jnp.reshape(x, (B, 16, 64))
    assert y1.shape == (B, 16, 64), y1.shape
    assert bool(jnp.all(y1 == ref1)), float(jnp.max(jnp.abs(y1 - ref1)))

    # View(-1): (2, 4, 16, 16) -> (2, 1024)
    y2 = jax.block_until_ready(view_forward(x, (-1,)))
    ref2 = jnp.reshape(x, (B, -1))
    assert y2.shape == (B, C * H * W), y2.shape
    assert bool(jnp.all(y2 == ref2)), float(jnp.max(jnp.abs(y2 - ref2)))

    print("KERNEL_OK")
</pallas_src>

<mosaic_0001>
module attributes {stable_mosaic.version = 11 : i64} {
  func.func @_copy_kernel(%arg0: memref<2x1024xf32, #tpu.memory_space<vmem>>, %arg1: memref<2x1024xf32, #tpu.memory_space<vmem>>) attributes {dimension_semantics = [], scalar_prefetch = 0 : i64, scratch_operands = 0 : i64, tpu.core_type = #tpu.core_type<tc>} {
    %c0 = arith.constant 0 : index
    %c0_0 = arith.constant 0 : index
    %0 = vector.load %arg0[%c0, %c0_0] : memref<2x1024xf32, #tpu.memory_space<vmem>>, vector<2x1024xf32>
    %c0_1 = arith.constant 0 : index
    %c0_2 = arith.constant 0 : index
    %1 = vector.load %arg1[%c0_1, %c0_2] : memref<2x1024xf32, #tpu.memory_space<vmem>>, vector<2x1024xf32>
    tpu.vector_store %arg1[%c0_1, %c0_2], %0 {strides = array<i32>} : memref<2x1024xf32, #tpu.memory_space<vmem>>, vector<2x1024xf32>,
    return
  }
}

</mosaic_0001>

<llo_original>
// kernel: tpu_custom_call.1
$region0: #{tpu_custom_call.1}
  #allocation0 [shape = 'u32[]', space=smem, size = 0x4, offset = 0x4, fixed_abs, tag = 'smem constant byte address 0x4 - core index']
  #allocation1 [shape = 'u32[144,128]{1,0:T(1,128)}', space=vmem, size = 0x12000, scoped, tag = 'internal scratch']
  %s0 = inlined_call_operand.hbm [shape: f32[2,1024], index: 0, kind: input, shape index: {}]
  %s1 = inlined_call_operand.hbm [shape: f32[2,1024], index: 1, kind: output, shape index: {}]
  %s2 = sld [smem:[#allocation0]]
  $region18: #{tpu_custom_call.1} parent=0
    _
  %s4 = ssub.s32 1, %s2
  %s5 = scalar_select 0, %s4, %s2
  $region1: #{tpu_custom_call.1} parent=0
    #allocation2 [shape = 'u8[8192]{0}', space=vmem, size = 0x2000, scoped, tag = 'input window, operand 0, single buffered']
    #allocation3 [shape = 's32[1]{0}', space=sflag, size = 0x4, scoped, tag = 'scoped memory for tpu_custom_call.1']
    #allocation4 [shape = 's32[1]{0}', space=sflag, size = 0x4, scoped, tag = 'scoped memory for tpu_custom_call.1']
    #allocation5 [shape = 'u8[8192]{0}', space=vmem, size = 0x2000, scoped, tag = 'output window, operand 0, single buffered']
    %6 = vsyncpa [#allocation3], 0
    %7 = vsyncpa [#allocation4], 0
    // Predicated region
    $region2: #{tpu_custom_call.1} parent=1 // pred_check
      _
    $region3: #{tpu_custom_call.1} parent=1 // pred_check_branch
      %9 = sbr.rel (0) target = $region5
    $region4: #{tpu_custom_call.1} parent=1 // pred_region
      %s11 = ssub.s32 256, 256
      %12 = vsyncadd [#allocation3], %s11
      %s14 = sshll.u32 [#allocation2], 4
      %s15 = int_to_ptr.vmem [resolvable:$true] %s14
      %17 = dma.hbm_to_vmem [thread:$0]  %s0, 256, %s15, [#allocation3]
    $region5: #{tpu_custom_call.1} parent=1 // pred_fallthru
      _
    // Predicated region
    $region6: #{tpu_custom_call.1} parent=1 // pred_check
      _
    $region7: #{tpu_custom_call.1} parent=1 // pred_check_branch
      %19 = sbr.rel (0) target = $region9
    $region8: #{tpu_custom_call.1} parent=1 // pred_region
      %20 = dma.done [#allocation3], 256
    $region9: #{tpu_custom_call.1} parent=1 // pred_fallthru
      _
    %v21 = vld [vmem:[#allocation2] sm:$0xff]
    %v22 = vld [vmem:[#allocation2 + $0x8] sm:$0xff]
    %23 = vst [vmem:[#allocation5] sm:$0xff] %v21
    %24 = vst [vmem:[#allocation5 + $0x8] sm:$0xff] %v22
    // Predicated region
    $region10: #{tpu_custom_call.1} parent=1 // pred_check
      _
    $region11: #{tpu_custom_call.1} parent=1 // pred_check_branch
      %26 = sbr.rel (0) target = $region13
    $region12: #{tpu_custom_call.1} parent=1 // pred_region
      %s28 = ssub.s32 256, 256
      %29 = vsyncadd [#allocation4], %s28
      %s31 = sshll.u32 [#allocation5], 4
      %s32 = int_to_ptr.vmem [resolvable:$true] %s31
      %34 = dma.vmem_to_hbm [thread:$0]  %s32, 256, %s1, [#allocation4]
    $region13: #{tpu_custom_call.1} parent=1 // pred_fallthru
      _
    // Predicated region
    $region14: #{tpu_custom_call.1} parent=1 // pred_check
      _
    $region15: #{tpu_custom_call.1} parent=1 // pred_check_branch
      %36 = sbr.rel (0) target = $region17
    $region16: #{tpu_custom_call.1} parent=1 // pred_region
      %37 = dma.done [#allocation4], 256
    $region17: #{tpu_custom_call.1} parent=1 // pred_fallthru
      _
    %38 = vsyncpa [#allocation3], 1
    %39 = vsyncpa [#allocation4], 1

</llo_original>
